<compile_context>
chip_gen: v7x
topology: tpu7x:2x2x1
jax: 0.10.0
libtpu: 0.0.40
codegen_flags: <defaults>
</compile_context>

<pallas_src>
import math

import jax
import jax.numpy as jnp
from jax.experimental import pallas as pl
from jax.experimental.pallas import tpu as pltpu


_TILE_N_THRESHOLD = 1024          # auto-switch to the N-tiled grid at/above this D
_DEFAULT_TILE_N = 256             # multiple of 128 (MXU lane width)
_DEFAULT_VMEM_LIMIT = 32 * 1024 * 1024
_VMEM_LIMIT_CAP = 100 * 1024 * 1024


def _nbytes(shape, dtype):
    return math.prod(shape) * jnp.dtype(dtype).itemsize


def _ts_embed_kernel(x_ref, w1_ref, b1_ref, w2_ref, b2_ref, o_ref):
    # linear_1: (B, Cin) @ (Cin, D) -- bf16 MXU inputs, f32 accumulation.
    x_bf = x_ref[...].astype(jnp.bfloat16)
    w1_bf = w1_ref[...].astype(jnp.bfloat16)          # no-op if stored bf16
    h = jnp.dot(x_bf, w1_bf, preferred_element_type=jnp.float32)
    h = h + b1_ref[...].astype(jnp.float32)
    # SiLU in f32: sigmoid -> EUP, mul -> VALU (v5e has no bf16 VPU/EUP path).
    h = h * jax.nn.sigmoid(h)
    # linear_2 (full weight, or one output-column tile of it in the tiled path).
    w2_bf = w2_ref[...].astype(jnp.bfloat16)          # no-op if stored bf16
    out = jnp.dot(h.astype(jnp.bfloat16), w2_bf,
                  preferred_element_type=jnp.float32)
    out = out + b2_ref[...].astype(jnp.float32)
    o_ref[...] = out.astype(o_ref.dtype)


def prepare_timestep_embedding_params(w1, b1, w2, b2):
    """One-time parameter prep (do at init, NOT per call): bf16 weights,
    f32 (1, D) biases.  Weights are stored transposed vs. PyTorch, i.e.
    (in_features, out_features), so the kernel computes plain x @ W + b."""
    d1 = w1.shape[1]
    d2 = w2.shape[1]
    return (w1.astype(jnp.bfloat16),
            jnp.reshape(b1, (1, d1)).astype(jnp.float32),
            w2.astype(jnp.bfloat16),
            jnp.reshape(b2, (1, d2)).astype(jnp.float32))


def timestep_embedding(sample, w1, b1, w2, b2, *, tile_n=None):
    """Forward pass of TimestepEmbedding.

    sample: (B, in_channels); w1: (in_channels, D); b1: (D,) or (1, D);
    w2: (D, D); b2: (D,) or (1, D).  Weights ideally pre-cast to bf16 via
    `prepare_timestep_embedding_params`.  Returns (B, D) in sample.dtype.
    """
    B, Cin = sample.shape
    D = w1.shape[1]
    assert w2.shape == (D, D)

    # No-ops if params were prepared with prepare_timestep_embedding_params.
    b1_2d = jnp.reshape(b1, (1, D)).astype(jnp.float32)
    b2_2d = jnp.reshape(b2, (1, D)).astype(jnp.float32)

    # ---- tile selection (static, from shapes) -------------------------------
    if tile_n is None:
        tile_n = 0
        if D >= _TILE_N_THRESHOLD:
            for cand in (_DEFAULT_TILE_N, 128):
                if D % cand == 0:
                    tile_n = cand
                    break
    if tile_n:
        assert tile_n % 128 == 0 and D % tile_n == 0, "tile_n must be a multiple of 128 dividing D"

    # ---- cost estimate (advisory) -------------------------------------------
    out_dtype = sample.dtype
    bytes_accessed = (
        _nbytes((B, Cin), sample.dtype)
        + _nbytes(w1.shape, w1.dtype) + _nbytes(w2.shape, w2.dtype)
        + _nbytes((1, D), jnp.float32) * 2
        + _nbytes((B, D), out_dtype)
    )
    cost = pl.CostEstimate(
        flops=2 * B * (Cin * D + D * D),
        transcendentals=B * D,                       # sigmoid
        bytes_accessed=bytes_accessed,
    )

    # ---- VMEM budget: raise the scoped limit only when actually needed ------
    scratch_bytes = B * D * 4 * 3                    # h (f32) + bf16 temporaries, rough
    needed = bytes_accessed + scratch_bytes
    compiler_kwargs = {}
    if needed > _DEFAULT_VMEM_LIMIT:
        compiler_kwargs["vmem_limit_bytes"] = int(
            min(needed * 1.5 + (4 << 20), _VMEM_LIMIT_CAP))

    if tile_n == 0:
        # Single-shot, grid-less: everything resident in VMEM once.
        vmem_spec = pl.BlockSpec(memory_space=pltpu.MemorySpace.VMEM)
        compiler_params = (pltpu.CompilerParams(**compiler_kwargs)
                           if compiler_kwargs else None)
        return pl.pallas_call(
            _ts_embed_kernel,
            out_shape=jax.ShapeDtypeStruct((B, D), out_dtype),
            in_specs=[vmem_spec] * 5,
            out_specs=vmem_spec,
            cost_estimate=cost,
            compiler_params=compiler_params,
        )(sample, w1, b1_2d, w2, b2_2d)

    # N-tiled path: 1-D "parallel" grid over linear_2's output columns.
    grid_spec = pltpu.PrefetchScalarGridSpec(
        num_scalar_prefetch=0,
        grid=(D // tile_n,),
        in_specs=[
            pl.BlockSpec((B, Cin), lambda j: (0, 0)),      # x   (resident)
            pl.BlockSpec((Cin, D), lambda j: (0, 0)),      # w1  (resident)
            pl.BlockSpec((1, D), lambda j: (0, 0)),        # b1  (resident)
            pl.BlockSpec((D, tile_n), lambda j: (0, j)),   # w2 column tile
            pl.BlockSpec((1, tile_n), lambda j: (0, j)),   # b2 tile
        ],
        out_specs=pl.BlockSpec((B, tile_n), lambda j: (0, j)),
    )
    return pl.pallas_call(
        _ts_embed_kernel,
        out_shape=jax.ShapeDtypeStruct((B, D), out_dtype),
        grid_spec=grid_spec,
        cost_estimate=cost,
        compiler_params=pltpu.CompilerParams(
            dimension_semantics=("parallel",), **compiler_kwargs),
    )(sample, w1, b1_2d, w2, b2_2d)


def _init_linear(key, fan_in, fan_out, dtype=jnp.float32):
    # Mirrors nn.Linear's uniform(-1/sqrt(fan_in), 1/sqrt(fan_in)) init.
    kw, kb = jax.random.split(key)
    bound = 1.0 / (fan_in ** 0.5)
    # Stored as (in_features, out_features), i.e. transposed vs. PyTorch weight.
    w = jax.random.uniform(kw, (fan_in, fan_out), dtype, -bound, bound)
    b = jax.random.uniform(kb, (fan_out,), dtype, -bound, bound)
    return w, b


def _ref_bf16(sample, w1, b1, w2, b2):
    # Reference with identical bf16-weight rounding / f32 accumulation.
    h = jnp.dot(sample.astype(jnp.bfloat16), w1.astype(jnp.bfloat16),
                preferred_element_type=jnp.float32) + jnp.reshape(b1, (1, -1))
    h = h * jax.nn.sigmoid(h)
    return jnp.dot(h.astype(jnp.bfloat16), w2.astype(jnp.bfloat16),
                   preferred_element_type=jnp.float32) + jnp.reshape(b2, (1, -1))


if __name__ == "__main__":
    in_channels = 32
    time_embed_dim = 128
    batch = 8

    key = jax.random.PRNGKey(0)
    k_x, k_l1, k_l2 = jax.random.split(key, 3)

    sample = jax.random.normal(k_x, (batch, in_channels), jnp.float32)
    w1_f32, b1_f32 = _init_linear(k_l1, in_channels, time_embed_dim)
    w2_f32, b2_f32 = _init_linear(k_l2, time_embed_dim, time_embed_dim)

    # One-time cast at "init" (NOT per call): bf16 weights, f32 (1, D) biases.
    w1, b1, w2, b2 = prepare_timestep_embedding_params(w1_f32, b1_f32, w2_f32, b2_f32)

    fwd = jax.jit(timestep_embedding)
    out = jax.block_until_ready(fwd(sample, w1, b1, w2, b2))
    assert out.shape == (batch, time_embed_dim)

    ref_bf = _ref_bf16(sample, w1, b1, w2, b2)
    assert jnp.allclose(out, ref_bf, atol=2e-2, rtol=2e-2), "mismatch vs bf16-weight reference"

    # Sanity vs the full-f32 PyTorch-equivalent path (loose tol: bf16 weights).
    h = sample @ w1_f32 + b1_f32
    h = h * jax.nn.sigmoid(h)
    ref_f32 = h @ w2_f32 + b2_f32
    assert jnp.allclose(out, ref_f32, atol=5e-2, rtol=5e-2), "mismatch vs f32 reference"

    # Also exercise the N-tiled "parallel"-grid path at a small size by forcing
    # tile_n=128 (production auto-selects it only for D >= 1024 / v7x sharding).
    D2 = 256
    w1b_f32, b1b_f32 = _init_linear(k_l1, in_channels, D2)
    w2b_f32, b2b_f32 = _init_linear(k_l2, D2, D2)
    params2 = prepare_timestep_embedding_params(w1b_f32, b1b_f32, w2b_f32, b2b_f32)
    out_tiled = jax.block_until_ready(
        timestep_embedding(sample, *params2, tile_n=128))
    assert out_tiled.shape == (batch, D2)
    ref_tiled = _ref_bf16(sample, *params2)
    assert jnp.allclose(out_tiled, ref_tiled, atol=2e-2, rtol=2e-2), "tiled path mismatch"

    print("KERNEL_OK")
</pallas_src>

<mosaic_0001>
module attributes {stable_mosaic.version = 11 : i64} {
  func.func @_ts_embed_kernel(%arg0: memref<8x32xf32, #tpu.memory_space<vmem>>, %arg1: memref<32x128xbf16, #tpu.memory_space<vmem>>, %arg2: memref<1x128xf32, #tpu.memory_space<vmem>>, %arg3: memref<128x128xbf16, #tpu.memory_space<vmem>>, %arg4: memref<1x128xf32, #tpu.memory_space<vmem>>, %arg5: memref<8x128xf32, #tpu.memory_space<vmem>>) attributes {dimension_semantics = [], scalar_prefetch = 0 : i64, scratch_operands = 0 : i64, tpu.core_type = #tpu.core_type<tc>} {
    %c0 = arith.constant 0 : index
    %c0_0 = arith.constant 0 : index
    %0 = vector.load %arg0[%c0, %c0_0] : memref<8x32xf32, #tpu.memory_space<vmem>>, vector<8x32xf32>
    %1 = arith.truncf %0 : vector<8x32xf32> to vector<8x32xbf16>
    %c0_1 = arith.constant 0 : index
    %c0_2 = arith.constant 0 : index
    %2 = vector.load %arg1[%c0_1, %c0_2] : memref<32x128xbf16, #tpu.memory_space<vmem>>, vector<32x128xbf16>
    %cst = arith.constant dense<0.000000e+00> : vector<8x128xf32>
    %3 = tpu.matmul %1, %2, %cst {dimension_numbers = #tpu.dot_dimension_numbers<[1], [0], [0], [1], [0, 0, 1, 1], [], []>} : vector<8x32xbf16>, vector<32x128xbf16>, vector<8x128xf32> -> vector<8x128xf32>
    %c0_3 = arith.constant 0 : index
    %c0_4 = arith.constant 0 : index
    %4 = vector.load %arg2[%c0_3, %c0_4] : memref<1x128xf32, #tpu.memory_space<vmem>>, vector<1x128xf32>
    %5 = vector.broadcast %4 : vector<1x128xf32> to vector<8x128xf32>
    %6 = arith.addf %3, %5 : vector<8x128xf32>
    %7 = arith.negf %6 : vector<8x128xf32>
    %8 = math.exp %7 : vector<8x128xf32>
    %cst_5 = arith.constant 1.000000e+00 : f32
    %9 = vector.broadcast %cst_5 : f32 to vector<8x128xf32>
    %10 = arith.addf %9, %8 : vector<8x128xf32>
    %11 = arith.divf %9, %10 : vector<8x128xf32>
    %12 = arith.mulf %6, %11 : vector<8x128xf32>
    %c0_6 = arith.constant 0 : index
    %c0_7 = arith.constant 0 : index
    %13 = vector.load %arg3[%c0_6, %c0_7] : memref<128x128xbf16, #tpu.memory_space<vmem>>, vector<128x128xbf16>
    %14 = arith.truncf %12 : vector<8x128xf32> to vector<8x128xbf16>
    %cst_8 = arith.constant dense<0.000000e+00> : vector<8x128xf32>
    %15 = tpu.matmul %14, %13, %cst_8 {dimension_numbers = #tpu.dot_dimension_numbers<[1], [0], [0], [1], [0, 0, 1, 1], [], []>} : vector<8x128xbf16>, vector<128x128xbf16>, vector<8x128xf32> -> vector<8x128xf32>
    %c0_9 = arith.constant 0 : index
    %c0_10 = arith.constant 0 : index
    %16 = vector.load %arg4[%c0_9, %c0_10] : memref<1x128xf32, #tpu.memory_space<vmem>>, vector<1x128xf32>
    %17 = vector.broadcast %16 : vector<1x128xf32> to vector<8x128xf32>
    %18 = arith.addf %15, %17 : vector<8x128xf32>
    %c0_11 = arith.constant 0 : index
    %c0_12 = arith.constant 0 : index
    %19 = vector.load %arg5[%c0_11, %c0_12] : memref<8x128xf32, #tpu.memory_space<vmem>>, vector<8x128xf32>
    tpu.vector_store %arg5[%c0_11, %c0_12], %18 {strides = array<i32>} : memref<8x128xf32, #tpu.memory_space<vmem>>, vector<8x128xf32>,
    return
  }
}

</mosaic_0001>

<llo_original>
// kernel: timestep_embedding.1
$region0: #{timestep_embedding.1}
  #allocation0 [shape = 'u32[]', space=smem, size = 0x4, offset = 0x4, fixed_abs, tag = 'smem constant byte address 0x4 - core index']
  #allocation1 [shape = 'u32[144,128]{1,0:T(1,128)}', space=vmem, size = 0x12000, scoped, tag = 'internal scratch']
  %s0 = inlined_call_operand.hbm [shape: f32[8,32], index: 0, kind: input, shape index: {}]
  %s1 = inlined_call_operand.hbm [shape: bf16[32,128], index: 1, kind: input, shape index: {}]
  %s2 = inlined_call_operand.vmem [shape: f32[1,128], index: 2, kind: input, shape index: {}]
  %s3 = inlined_call_operand.hbm [shape: bf16[128,128], index: 3, kind: input, shape index: {}]
  %s4 = inlined_call_operand.vmem [shape: f32[1,128], index: 4, kind: input, shape index: {}]
  %s5 = inlined_call_operand.hbm [shape: f32[8,128], index: 5, kind: output, shape index: {}]
  %s6 = sld [smem:[#allocation0]]
  $region42: #{timestep_embedding.1} parent=0
    _
  %s8 = ssub.s32 1, %s6
  %s9 = scalar_select 0, %s8, %s6
  $region1: #{timestep_embedding.1} parent=0
    #allocation2 [shape = 'u8[4096]{0}', space=vmem, size = 0x1000, scoped, tag = 'input window, operand 0, single buffered']
    #allocation3 [shape = 's32[1]{0}', space=sflag, size = 0x4, scoped, tag = 'scoped memory for timestep_embedding.1']
    #allocation4 [shape = 's32[1]{0}', space=sflag, size = 0x4, scoped, tag = 'scoped memory for timestep_embedding.1']
    #allocation5 [shape = 'u8[8192]{0}', space=vmem, size = 0x2000, scoped, tag = 'input window, operand 1, single buffered']
    #allocation6 [shape = 's32[1]{0}', space=sflag, size = 0x4, scoped, tag = 'scoped memory for timestep_embedding.1']
    #allocation7 [shape = 'u8[32768]{0}', space=vmem, size = 0x8000, scoped, tag = 'input window, operand 3, single buffered']
    #allocation8 [shape = 'u8[4096]{0}', space=vmem, size = 0x1000, scoped, tag = 'output window, operand 0, single buffered']
    %10 = vsyncpa [#allocation3], 0
    %11 = vsyncpa [#allocation6], 0
    %12 = vsyncpa [#allocation4], 0
    // Predicated region
    $region2: #{timestep_embedding.1} parent=1 // pred_check
      _
    $region3: #{timestep_embedding.1} parent=1 // pred_check_branch
      %14 = sbr.rel (0) target = $region5
    $region4: #{timestep_embedding.1} parent=1 // pred_region
      %s16 = ssub.s32 128, 128
      %17 = vsyncadd [#allocation3], %s16
      %s19 = sshll.u32 [#allocation2], 4
      %s20 = int_to_ptr.vmem [resolvable:$true] %s19
      %22 = dma.hbm_to_vmem [thread:$0]  %s0, 128, %s20, [#allocation3]
    $region5: #{timestep_embedding.1} parent=1 // pred_fallthru
      _
    // Predicated region
    $region6: #{timestep_embedding.1} parent=1 // pred_check
      _
    $region7: #{timestep_embedding.1} parent=1 // pred_check_branch
      %24 = sbr.rel (0) target = $region9
    $region8: #{timestep_embedding.1} parent=1 // pred_region
      %s26 = ssub.s32 256, 256
      %27 = vsyncadd [#allocation6], %s26
      %s28 = sshll.u32 [#allocation5], 4
      %s29 = int_to_ptr.vmem [resolvable:$true] %s28
      %34 = dma.hbm_to_vmem [thread:$0]  %s1, 256, %s29, [#allocation6], 64, 64, 4
    $region9: #{timestep_embedding.1} parent=1 // pred_fallthru
      _
    // Predicated region
    $region10: #{timestep_embedding.1} parent=1 // pred_check
      _
    $region11: #{timestep_embedding.1} parent=1 // pred_check_branch
      %36 = sbr.rel (0) target = $region13
    $region12: #{timestep_embedding.1} parent=1 // pred_region
      _
    $region13: #{timestep_embedding.1} parent=1 // pred_fallthru
      _
    // Predicated region
    $region14: #{timestep_embedding.1} parent=1 // pred_check
      _
    $region15: #{timestep_embedding.1} parent=1 // pred_check_branch
      %38 = sbr.rel (0) target = $region17
    $region16: #{timestep_embedding.1} parent=1 // pred_region
      %s40 = ssub.s32 1024, 1024
      %41 = vsyncadd [#allocation6], %s40
      %s42 = sshll.u32 [#allocation7], 4
      %s43 = int_to_ptr.vmem [resolvable:$true] %s42
      %48 = dma.hbm_to_vmem [thread:$0]  %s3, 1024, %s43, [#allocation6], 64, 64, 4
    $region17: #{timestep_embedding.1} parent=1 // pred_fallthru
      _
    // Predicated region
    $region18: #{timestep_embedding.1} parent=1 // pred_check
      _
    $region19: #{timestep_embedding.1} parent=1 // pred_check_branch
      %50 = sbr.rel (0) target = $region21
    $region20: #{timestep_embedding.1} parent=1 // pred_region
      _
    $region21: #{timestep_embedding.1} parent=1 // pred_fallthru
      _
    // Predicated region
    $region22: #{timestep_embedding.1} parent=1 // pred_check
      _
    $region23: #{timestep_embedding.1} parent=1 // pred_check_branch
      %52 = sbr.rel (0) target = $region25
    $region24: #{timestep_embedding.1} parent=1 // pred_region
      %53 = dma.done [#allocation3], 128
    $region25: #{timestep_embedding.1} parent=1 // pred_fallthru
      _
    // Predicated region
    $region26: #{timestep_embedding.1} parent=1 // pred_check
      _
    $region27: #{timestep_embedding.1} parent=1 // pred_check_branch
      %55 = sbr.rel (0) target = $region29
    $region28: #{timestep_embedding.1} parent=1 // pred_region
      %56 = dma.done [#allocation6], 256
    $region29: #{timestep_embedding.1} parent=1 // pred_fallthru
      _
    // Predicated region
    $region30: #{timestep_embedding.1} parent=1 // pred_check
      _
    $region31: #{timestep_embedding.1} parent=1 // pred_check_branch
      %58 = sbr.rel (0) target = $region33
    $region32: #{timestep_embedding.1} parent=1 // pred_region
      %59 = dma.done [#allocation6], 1024
    $region33: #{timestep_embedding.1} parent=1 // pred_fallthru
      _
    %v61 = vld [vmem:[#allocation2] sm:$0xff]
    %v62 = vpack.c.bf16 %v61, %v61
    %v63 = vld [vmem:[#allocation5] sm:$0xf]
    %v64 = vld [vmem:[#allocation5 + $0x4] sm:$0xf]
    %v65 = vld [vmem:[#allocation5 + $0x8] sm:$0xf]
    %v66 = vld [vmem:[#allocation5 + $0xc] sm:$0xf]
    %v67 = vld [vmem:[%s2] sm:$0x1]
    %v69 = vlaneseq
    %v70 = vshrl.u32 %v69, 7
    %v71 = vsub.s32 0, %v70
    %v72 = vrot.slane %v67, %v71
    %v78 = vunpack.c.l.b16 %v63
    %v79 = vunpack.c.l.b16 %v64
    %v80 = vunpack.c.l.b16 %v65
    %v81 = vunpack.c.l.b16 %v66
    %v82 = vpack.c.b16 %v79, %v78
    %v83 = vpack.c.b16 %v81, %v80
    %vm86 = vcmask 261120
    %v88 = vsel %vm86, %v62, 0
    %90 = vmatprep.subr.bf16.mxu0 0
    %91 = vmatpush1.bf16.msra.mxu0 %v82
    %92 = vmatprep.subr.bf16.mxu0 0
    %93 = vmatpush1.bf16.msra.mxu0 %v83
    %94 = vmatprep.subr.bf16.mxu0 0
    %95 = vmatpush1.bf16.msra.mxu0 0
    %96 = vmatprep.subr.bf16.mxu0 0
    %97 = vmatpush1.bf16.msra.mxu0 0
    %98 = vmatprep.subr.bf16.mxu0 0
    %99 = vmatpush1.bf16.msra.mxu0 0
    %100 = vmatprep.subr.bf16.mxu0 0
    %101 = vmatpush1.bf16.msra.mxu0 0
    %102 = vmatprep.subr.bf16.mxu0 0
    %103 = vmatpush1.bf16.msra.mxu0 0
    %104 = vmatprep.subr.bf16.mxu0 0
    %105 = vmatpush1.bf16.msra.mxu0 0
    %106 = vmatprep.subr.bf16.mxu0 0
    %107 = vmatpush1.bf16.msra.mxu0 0
    %108 = vmatprep.subr.bf16.mxu0 0
    %109 = vmatpush1.bf16.msra.mxu0 0
    %110 = vmatprep.subr.bf16.mxu0 0
    %111 = vmatpush1.bf16.msra.mxu0 0
    %112 = vmatprep.subr.bf16.mxu0 0
    %113 = vmatpush1.bf16.msra.mxu0 0
    %114 = vmatprep.subr.bf16.mxu0 0
    %115 = vmatpush1.bf16.msra.mxu0 0
    %116 = vmatprep.subr.bf16.mxu0 0
    %117 = vmatpush1.bf16.msra.mxu0 0
    %118 = vmatprep.subr.bf16.mxu0 0
    %119 = vmatpush1.bf16.msra.mxu0 0
    %120 = vmatprep.subr.bf16.mxu0 0
    %121 = vmatpush1.bf16.msra.mxu0 0
    %122 = vmatprep.mubr.bf16.mxu0 0
    %123 = vmatmul.mubr.bf16.gmra.mrb[0].mxu0 %v88
    %v124 = vpop.f32.mrb[0].mxu0
    %v125 = vadd.f32 %v72, %v124
    %v126 = vpop.f32.mrb[0].mxu0
    %v127 = vpop.f32.mrb[0].mxu0
    %v128 = vpop.f32.mrb[0].mxu0
    %129 = vdwg.mxu0
    %v130 = vxor.u32 %v125, 2147483648
    %v131 = vmul.f32 %v130, 1.442695
    %v132 = vpow.pop %v131
    %v133 = vadd.f32 %v132, 1.0
    %v134 = vrcp.pop %v133
    %v135 = vmul.f32 1.0, %v134
    %v136 = vmul.f32 %v125, %v135
    %v137 = vld [vmem:[#allocation7] sm:$0xf]
    %v138 = vld [vmem:[#allocation7 + $0x4] sm:$0xf]
    %v139 = vld [vmem:[#allocation7 + $0x8] sm:$0xf]
    %v140 = vld [vmem:[#allocation7 + $0xc] sm:$0xf]
    %v141 = vld [vmem:[#allocation7 + $0x10] sm:$0xf]
    %v142 = vld [vmem:[#allocation7 + $0x14] sm:$0xf]
    %v143 = vld [vmem:[#allocation7 + $0x18] sm:$0xf]
    %v144 = vld [vmem:[#allocation7 + $0x1c] sm:$0xf]
    %v145 = vld [vmem:[#allocation7 + $0x20] sm:$0xf]
    %v146 = vld [vmem:[#allocation7 + $0x24] sm:$0xf]
    %v147 = vld [vmem:[#allocation7 + $0x28] sm:$0xf]
    %v148 = vld [vmem:[#allocation7 + $0x2c] sm:$0xf]
    %v149 = vld [vmem:[#allocation7 + $0x30] sm:$0xf]
    %v150 = vld [vmem:[#allocation7 + $0x34] sm:$0xf]
    %v151 = vld [vmem:[#allocation7 + $0x38] sm:$0xf]
    %v152 = vld [vmem:[#allocation7 + $0x3c] sm:$0xf]
    %v153 = vpack.c.bf16 %v136, %v136
    %v154 = vld [vmem:[%s4] sm:$0x1]
    %v156 = vlaneseq
    %v157 = vshrl.u32 %v156, 7
    %v158 = vsub.s32 0, %v157
    %v159 = vrot.slane %v154, %v158
    %v177 = vunpack.c.l.b16 %v137
    %v178 = vunpack.c.l.b16 %v138
    %v179 = vunpack.c.l.b16 %v139
    %v180 = vunpack.c.l.b16 %v140
    %v181 = vunpack.c.l.b16 %v141
    %v182 = vunpack.c.l.b16 %v142
    %v183 = vunpack.c.l.b16 %v143
    %v184 = vunpack.c.l.b16 %v144
    %v185 = vunpack.c.l.b16 %v145
    %v186 = vunpack.c.l.b16 %v146
    %v187 = vunpack.c.l.b16 %v147
    %v188 = vunpack.c.l.b16 %v148
    %v189 = vunpack.c.l.b16 %v149
    %v190 = vunpack.c.l.b16 %v150
    %v191 = vunpack.c.l.b16 %v151
    %v192 = vunpack.c.l.b16 %v152
    %v193 = vpack.c.b16 %v178, %v177
    %v194 = vpack.c.b16 %v180, %v179
    %v195 = vpack.c.b16 %v182, %v181
    %v196 = vpack.c.b16 %v184, %v183
    %v197 = vpack.c.b16 %v186, %v185
    %v198 = vpack.c.b16 %v188, %v187
    %v199 = vpack.c.b16 %v190, %v189
    %v200 = vpack.c.b16 %v192, %v191
    %209 = vmatprep.subr.bf16.mxu0 0
    %210 = vmatpush1.bf16.msra.mxu0 %v193
    %211 = vmatprep.subr.bf16.mxu0 0
    %212 = vmatpush1.bf16.msra.mxu0 %v194
    %213 = vmatprep.subr.bf16.mxu0 0
    %214 = vmatpush1.bf16.msra.mxu0 %v195
    %215 = vmatprep.subr.bf16.mxu0 0
    %216 = vmatpush1.bf16.msra.mxu0 %v196
    %217 = vmatprep.subr.bf16.mxu0 0
    %218 = vmatpush1.bf16.msra.mxu0 %v197
    %219 = vmatprep.subr.bf16.mxu0 0
    %220 = vmatpush1.bf16.msra.mxu0 %v198
    %221 = vmatprep.subr.bf16.mxu0 0
    %222 = vmatpush1.bf16.msra.mxu0 %v199
    %223 = vmatprep.subr.bf16.mxu0 0
    %224 = vmatpush1.bf16.msra.mxu0 %v200
    %225 = vmatprep.subr.bf16.mxu0 0
    %226 = vmatpush1.bf16.msra.mxu0 0
    %227 = vmatprep.subr.bf16.mxu0 0
    %228 = vmatpush1.bf16.msra.mxu0 0
    %229 = vmatprep.subr.bf16.mxu0 0
    %230 = vmatpush1.bf16.msra.mxu0 0
    %231 = vmatprep.subr.bf16.mxu0 0
    %232 = vmatpush1.bf16.msra.mxu0 0
    %233 = vmatprep.subr.bf16.mxu0 0
    %234 = vmatpush1.bf16.msra.mxu0 0
    %235 = vmatprep.subr.bf16.mxu0 0
    %236 = vmatpush1.bf16.msra.mxu0 0
    %237 = vmatprep.subr.bf16.mxu0 0
    %238 = vmatpush1.bf16.msra.mxu0 0
    %239 = vmatprep.subr.bf16.mxu0 0
    %240 = vmatpush1.bf16.msra.mxu0 0
    %241 = vmatprep.mubr.bf16.mxu0 0
    %242 = vmatmul.mubr.bf16.gmra.mrb[0].mxu0 %v153
    %v243 = vpop.f32.mrb[0].mxu0
    %v244 = vadd.f32 %v159, %v243
    %v245 = vpop.f32.mrb[0].mxu0
    %v246 = vpop.f32.mrb[0].mxu0
    %v247 = vpop.f32.mrb[0].mxu0
    %248 = vdwg.mxu0
    %249 = vst [vmem:[#allocation8] sm:$0xff] %v244
    // Predicated region
    $region34: #{timestep_embedding.1} parent=1 // pred_check
      _
    $region35: #{timestep_embedding.1} parent=1 // pred_check_branch
      %251 = sbr.rel (0) target = $region37
    $region36: #{timestep_embedding.1} parent=1 // pred_region
      %s253 = ssub.s32 128, 128
      %254 = vsyncadd [#allocation4], %s253
      %s256 = sshll.u32 [#allocation8], 4
      %s257 = int_to_ptr.vmem [resolvable:$true] %s256
      %259 = dma.vmem_to_hbm [thread:$0]  %s257, 128, %s5, [#allocation4]
    $region37: #{timestep_embedding.1} parent=1 // pred_fallthru
      _
    // Predicated region
    $region38: #{timestep_embedding.1} parent=1 // pred_check
      _
    $region39: #{timestep_embedding.1} parent=1 // pred_check_branch
      %261 = sbr.rel (0) target = $region41
    $region40: #{timestep_embedding.1} parent=1 // pred_region
      %262 = dma.done [#allocation4], 128
    $region41: #{timestep_embedding.1} parent=1 // pred_fallthru
      _
    %263 = vsyncpa [#allocation3], 1
    %264 = vsyncpa [#allocation6], 1
    %265 = vsyncpa [#allocation4], 1

</llo_original>
